<compile_context>
chip_gen: v5e
topology: v5e:2x2
jax: 0.10.0
libtpu: 0.0.40
codegen_flags: <defaults>
</compile_context>

<pallas_src>
import functools

import jax
import jax.numpy as jnp
from jax.experimental import pallas as pl
from jax.experimental.pallas import tpu as pltpu

_INV_SQRT2 = 0.7071067811865476
_VMEM_LIMIT_BYTES = 48 * 1024 * 1024      # safe on v7x (64 MiB), fine on v5e/v6e
_PIPELINE_BUDGET_BYTES = 24 * 1024 * 1024  # budget for double-buffered tiles


def _gelu_exact(x):
    # Matches torch.nn.functional.gelu (erf-based, approximate='none').
    # (tanh approx would route to the EUP slot but changes numerics vs PyTorch.)
    return 0.5 * x * (1.0 + jax.lax.erf(x * _INV_SQRT2))


# ----------------------------------------------------------------------------
# Kernel 1: per-frequency complex channel mixing (SpectralConv2d hot loop).
#   (xr + i*xi)[k,b,:] @ (wr + i*wi)[k,:,:]  -> packed [real | imag] output.
# Weights are streamed un-duplicated (wr, wi); 4 real batched MXU matmuls,
# f32 accumulation; single lane-packed (kt, B, 2*Cout) output store.
# ----------------------------------------------------------------------------
def _spectral_mul_kernel(xr_ref, xi_ref, wr_ref, wi_ref, o_ref):
    dn = (((2,), (1,)), ((0,), (0,)))
    xr, xi = xr_ref[...], xi_ref[...]
    wr, wi = wr_ref[...], wi_ref[...]
    rr = jax.lax.dot_general(xr, wr, dn, preferred_element_type=jnp.float32)
    ii = jax.lax.dot_general(xi, wi, dn, preferred_element_type=jnp.float32)
    ri = jax.lax.dot_general(xr, wi, dn, preferred_element_type=jnp.float32)
    ir = jax.lax.dot_general(xi, wr, dn, preferred_element_type=jnp.float32)
    o_ref[...] = jnp.concatenate([rr - ii, ri + ir], axis=-1).astype(o_ref.dtype)


# ----------------------------------------------------------------------------
# Kernel 2: fused pointwise path (channels-major, pixels on the lane axis)
#   h   = gelu(W1 @ s + b1)
#   out = W2 @ h + Ww @ x + (b2 + bw)   [; gelu]
# ----------------------------------------------------------------------------
def _fused_pointwise_kernel(s_ref, x_ref, w1_ref, b1_ref, w2_ref, ww_ref,
                            bcat_ref, o_ref, *, apply_gelu):
    s = s_ref[0]                        # (C, T) compute dtype
    xb = x_ref[0]                       # (C, T) compute dtype
    h = jnp.dot(w1_ref[...], s, preferred_element_type=jnp.float32) + b1_ref[...]
    h = _gelu_exact(h).astype(w2_ref.dtype)
    out = (jnp.dot(w2_ref[...], h, preferred_element_type=jnp.float32)
           + jnp.dot(ww_ref[...], xb, preferred_element_type=jnp.float32)
           + bcat_ref[...])
    if apply_gelu:
        out = _gelu_exact(out)
    o_ref[0] = out.astype(o_ref.dtype)


# ----------------------------------------------------------------------------
# VMEM-aware block sizing helpers
# ----------------------------------------------------------------------------
def _auto_spectral_kt(K, B, Cin, Cout, in_bytes, budget=_PIPELINE_BUDGET_BYTES):
    # Double-buffered per-step bytes: xr+xi, wr+wi (compute dtype) + packed f32 out.
    per_k = 2 * ((2 * B * Cin + 2 * Cin * Cout) * in_bytes + 2 * B * Cout * 4)
    kt = max(1, min(K, budget // max(per_k, 1)))
    if K >= 4:                       # keep >=4 grid steps (megacore + pipeline)
        kt = min(kt, pl.cdiv(K, 4))
    elif K >= 2:
        kt = min(kt, pl.cdiv(K, 2))
    for d in range(int(kt), 0, -1):  # prefer a divisor of K (no pad copy)
        if K % d == 0:
            return d
    return int(kt)


def _auto_pixel_tile(HW, C, B, budget=_PIPELINE_BUDGET_BYTES):
    # ~32*C bytes/pixel covers double-buffered bf16 s/x + f32 out + in-kernel temps.
    t_max = max(128, (budget // (32 * C)) // 128 * 128)
    if HW % 128 != 0:
        return int(min(t_max, ((HW + 127) // 128) * 128))
    best, t = 128, 128
    while t <= min(HW, t_max):
        # keep >=2 total grid steps so a v7x TensorCore never idles
        if HW % t == 0 and (B * (HW // t) >= 2 or (t == HW == 128)):
            best = t
        t += 128
    return int(best)


# ----------------------------------------------------------------------------
# SpectralConv2d forward (FFT in JAX, channel mixing in Pallas)
# ----------------------------------------------------------------------------
def spectral_conv2d(x, wr_k, wi_k, modes1, modes2, *, compute_dtype=jnp.bfloat16):
    B, Cin, H, W = x.shape
    K, Cin_w, Cout = wr_k.shape
    Wf = W // 2 + 1
    assert Cin_w == Cin and K == 2 * modes1 * modes2
    assert 2 * modes1 <= H and modes2 <= Wf, "frequency mode slices overlap"

    # TODO(synk): rfft2 / irfft2 have no Pallas primitive; done in plain JAX.
    x_ft = jnp.fft.rfft2(x)                               # (B, Cin, H, Wf) c64
    top = x_ft[:, :, :modes1, :modes2]
    bot = x_ft[:, :, H - modes1:, :modes2]

    def to_kbi(z):   # (B, Cin, m1, m2) -> (m1*m2, B, Cin)
        return jnp.transpose(z, (2, 3, 0, 1)).reshape(modes1 * modes2, B, Cin)

    xr = jnp.concatenate([to_kbi(top.real), to_kbi(bot.real)], axis=0)
    xi = jnp.concatenate([to_kbi(top.imag), to_kbi(bot.imag)], axis=0)
    xr = xr.astype(compute_dtype)
    xi = xi.astype(compute_dtype)

    in_bytes = jnp.dtype(compute_dtype).itemsize
    kt = _auto_spectral_kt(K, B, Cin, Cout, in_bytes)
    K_pad = pl.cdiv(K, kt) * kt
    wr, wi = wr_k, wi_k
    if K_pad != K:
        pad = ((0, K_pad - K), (0, 0), (0, 0))
        xr, xi = jnp.pad(xr, pad), jnp.pad(xi, pad)
        wr, wi = jnp.pad(wr, pad), jnp.pad(wi, pad)

    out_pack = pl.pallas_call(
        _spectral_mul_kernel,
        out_shape=jax.ShapeDtypeStruct((K_pad, B, 2 * Cout), jnp.float32),
        grid=(K_pad // kt,),
        in_specs=[
            pl.BlockSpec((kt, B, Cin), lambda k: (k, 0, 0)),
            pl.BlockSpec((kt, B, Cin), lambda k: (k, 0, 0)),
            pl.BlockSpec((kt, Cin, Cout), lambda k: (k, 0, 0)),
            pl.BlockSpec((kt, Cin, Cout), lambda k: (k, 0, 0)),
        ],
        out_specs=pl.BlockSpec((kt, B, 2 * Cout), lambda k: (k, 0, 0)),
        compiler_params=pltpu.CompilerParams(
            dimension_semantics=("parallel",),
            vmem_limit_bytes=_VMEM_LIMIT_BYTES),
        cost_estimate=pl.CostEstimate(
            flops=8 * K_pad * B * Cin * Cout,
            transcendentals=0,
            bytes_accessed=in_bytes * (2 * K_pad * B * Cin + 2 * K_pad * Cin * Cout)
                           + 4 * K_pad * B * 2 * Cout),
    )(xr, xi, wr, wi)

    out_r = out_pack[:K, :, :Cout]                                       # (K,B,Cout)
    out_i = out_pack[:K, :, Cout:]
    out_c = (out_r + 1j * out_i).astype(jnp.complex64)
    out_c = out_c.reshape(2, modes1, modes2, B, Cout)
    out_top = jnp.transpose(out_c[0], (2, 3, 0, 1))                      # (B,Cout,m1,m2)
    out_bot = jnp.transpose(out_c[1], (2, 3, 0, 1))

    out_ft = jnp.zeros((B, Cout, H, Wf), dtype=jnp.complex64)
    out_ft = out_ft.at[:, :, :modes1, :modes2].set(out_top)
    out_ft = out_ft.at[:, :, H - modes1:, :modes2].set(out_bot)
    return jnp.fft.irfft2(out_ft, s=(H, W))                              # (B,Cout,H,W)


# ----------------------------------------------------------------------------
# Fused ConvMLP + skip conv + add (+ optional GELU), channels-major layout
# ----------------------------------------------------------------------------
def fused_pointwise(spec, x, w1, b1, w2, ww, b_cat, apply_gelu,
                    *, compute_dtype=jnp.bfloat16):
    B, C, H, W = x.shape
    HW = H * W

    s2 = spec.reshape(B, C, HW).astype(compute_dtype)
    x2 = x.reshape(B, C, HW).astype(compute_dtype)

    tile_hw = _auto_pixel_tile(HW, C, B)
    HW_pad = pl.cdiv(HW, tile_hw) * tile_hw
    if HW_pad != HW:
        pad = ((0, 0), (0, 0), (0, HW_pad - HW))
        s2, x2 = jnp.pad(s2, pad), jnp.pad(x2, pad)

    kernel = functools.partial(_fused_pointwise_kernel, apply_gelu=apply_gelu)
    in_bytes = jnp.dtype(compute_dtype).itemsize
    out = pl.pallas_call(
        kernel,
        out_shape=jax.ShapeDtypeStruct((B, C, HW_pad), jnp.float32),
        grid=(B, HW_pad // tile_hw),
        in_specs=[
            pl.BlockSpec((1, C, tile_hw), lambda b, t: (b, 0, t)),
            pl.BlockSpec((1, C, tile_hw), lambda b, t: (b, 0, t)),
            pl.BlockSpec(w1.shape, lambda b, t: (0, 0)),
            pl.BlockSpec(b1.shape, lambda b, t: (0, 0)),
            pl.BlockSpec(w2.shape, lambda b, t: (0, 0)),
            pl.BlockSpec(ww.shape, lambda b, t: (0, 0)),
            pl.BlockSpec(b_cat.shape, lambda b, t: (0, 0)),
        ],
        out_specs=pl.BlockSpec((1, C, tile_hw), lambda b, t: (b, 0, t)),
        compiler_params=pltpu.CompilerParams(
            dimension_semantics=("parallel", "parallel"),
            vmem_limit_bytes=_VMEM_LIMIT_BYTES),
        cost_estimate=pl.CostEstimate(
            flops=2 * B * HW_pad * C * (3 * C),
            transcendentals=B * HW_pad * C * (2 if apply_gelu else 1),
            bytes_accessed=in_bytes * (2 * B * C * HW_pad + 3 * C * C)
                           + 4 * (B * C * HW_pad + 2 * C)),
    )(s2, x2, w1, b1, w2, ww, b_cat)

    return out[:, :, :HW].reshape(B, C, H, W)


# ----------------------------------------------------------------------------
# Parameters (deterministic synthetic init; shapes follow the PyTorch module)
# ----------------------------------------------------------------------------
def init_params(key, width, modes1, modes2):
    keys = jax.random.split(key, 5)
    scale = 1.0 / (width * width)

    def cplx_weight(k):
        kr, ki = jax.random.split(k)
        shape = (width, width, modes1, modes2)  # (in, out, m1, m2)
        return (scale * jax.random.uniform(kr, shape, jnp.float32),
                scale * jax.random.uniform(ki, shape, jnp.float32))

    def conv1x1_init(k, cin, cout):
        kw, kb = jax.random.split(k)
        bound = 1.0 / (cin ** 0.5)
        # stored PyTorch-style (Cout, Cin); y = W @ x over the channel axis
        w = jax.random.uniform(kw, (cout, cin), jnp.float32, -bound, bound)
        b = jax.random.uniform(kb, (cout, 1), jnp.float32, -bound, bound)
        return w, b

    w1r, w1i = cplx_weight(keys[0])
    w2r, w2i = cplx_weight(keys[1])
    mlp1_w, mlp1_b = conv1x1_init(keys[2], width, width)
    mlp2_w, mlp2_b = conv1x1_init(keys[3], width, width)
    w_w, w_b = conv1x1_init(keys[4], width, width)
    return dict(w1r=w1r, w1i=w1i, w2r=w2r, w2i=w2i,
                mlp1_w=mlp1_w, mlp1_b=mlp1_b,
                mlp2_w=mlp2_w, mlp2_b=mlp2_b,
                w_w=w_w, w_b=w_b)


def prepare_kernel_params(params, modes1, modes2, compute_dtype=jnp.bfloat16):
    """Hoist all weight-side packing / casting out of the forward pass."""
    def to_kio(w):   # (Cin, Cout, m1, m2) -> (m1*m2, Cin, Cout)
        cin, cout = w.shape[0], w.shape[1]
        return jnp.transpose(w, (2, 3, 0, 1)).reshape(modes1 * modes2, cin, cout)

    wr_k = jnp.concatenate([to_kio(params["w1r"]), to_kio(params["w2r"])], axis=0)
    wi_k = jnp.concatenate([to_kio(params["w1i"]), to_kio(params["w2i"])], axis=0)
    return dict(
        wr_k=wr_k.astype(compute_dtype),                  # (K, Cin, Cout)
        wi_k=wi_k.astype(compute_dtype),
        mlp1_w=params["mlp1_w"].astype(compute_dtype),
        mlp1_b=params["mlp1_b"].astype(jnp.float32),
        mlp2_w=params["mlp2_w"].astype(compute_dtype),
        w_w=params["w_w"].astype(compute_dtype),
        b_cat=(params["mlp2_b"] + params["w_b"]).astype(jnp.float32),
    )


def neural_operator_forward(x, kparams, modes1, modes2, activation="none",
                            compute_dtype=jnp.bfloat16):
    spec = spectral_conv2d(x, kparams["wr_k"], kparams["wi_k"], modes1, modes2,
                           compute_dtype=compute_dtype)
    return fused_pointwise(spec, x,
                           kparams["mlp1_w"], kparams["mlp1_b"],
                           kparams["mlp2_w"], kparams["w_w"], kparams["b_cat"],
                           apply_gelu=(activation == "gelu"),
                           compute_dtype=compute_dtype)


# ----------------------------------------------------------------------------
# Pure-JAX reference (mirrors the PyTorch module, f32 throughout)
# ----------------------------------------------------------------------------
def reference_forward(x, params, modes1, modes2, activation="none"):
    B, C, H, W = x.shape
    Wf = W // 2 + 1
    w1c = params["w1r"] + 1j * params["w1i"]
    w2c = params["w2r"] + 1j * params["w2i"]
    x_ft = jnp.fft.rfft2(x)
    out_ft = jnp.zeros((B, C, H, Wf), dtype=jnp.complex64)
    out_ft = out_ft.at[:, :, :modes1, :modes2].set(
        jnp.einsum("bixy,ioxy->boxy", x_ft[:, :, :modes1, :modes2], w1c))
    out_ft = out_ft.at[:, :, H - modes1:, :modes2].set(
        jnp.einsum("bixy,ioxy->boxy", x_ft[:, :, H - modes1:, :modes2], w2c))
    spec = jnp.fft.irfft2(out_ft, s=(H, W))

    def conv1x1(z, w, b):   # w: (Cout, Cin), b: (Cout, 1)
        return jnp.einsum("bihw,oi->bohw", z, w) + b.reshape(1, -1, 1, 1)

    h = jax.nn.gelu(conv1x1(spec, params["mlp1_w"], params["mlp1_b"]), approximate=False)
    x1 = conv1x1(h, params["mlp2_w"], params["mlp2_b"])
    x2 = conv1x1(x, params["w_w"], params["w_b"])
    out = x1 + x2
    if activation == "gelu":
        out = jax.nn.gelu(out, approximate=False)
    return out


if __name__ == "__main__":
    B, width, H, W = 2, 8, 16, 16
    modes1, modes2 = 4, 4
    activation = "gelu"

    key = jax.random.PRNGKey(0)
    kx, kp = jax.random.split(key)
    x = jax.random.normal(kx, (B, width, H, W), jnp.float32)
    params = init_params(kp, width, modes1, modes2)
    kparams = prepare_kernel_params(params, modes1, modes2)

    out = neural_operator_forward(x, kparams, modes1, modes2, activation)
    out = jax.block_until_ready(out)
    assert out.shape == (B, width, H, W)

    ref = reference_forward(x, params, modes1, modes2, activation)
    err = float(jnp.max(jnp.abs(out - ref)))
    tol = 5e-2 * max(1.0, float(jnp.max(jnp.abs(ref))))   # bf16 streaming tolerance
    assert err < tol, f"max abs error {err} (tol {tol})"

    print("KERNEL_OK")
</pallas_src>

<mosaic_0001>
module attributes {stable_mosaic.version = 11 : i64} {
  func.func @_spectral_mul_kernel(%arg0: i32, %arg1: memref<8x2x8xbf16, #tpu.memory_space<vmem>>, %arg2: memref<8x2x8xbf16, #tpu.memory_space<vmem>>, %arg3: memref<8x8x8xbf16, #tpu.memory_space<vmem>>, %arg4: memref<8x8x8xbf16, #tpu.memory_space<vmem>>, %arg5: memref<8x2x16xf32, #tpu.memory_space<vmem>>) attributes {dimension_semantics = [#tpu.dimension_semantics<parallel>], iteration_bounds = array<i64: 4>, scalar_prefetch = 0 : i64, scratch_operands = 0 : i64, tpu.core_type = #tpu.core_type<tc>, window_params = [{transform_indices = @transform_0, window_bounds = array<i64: 8, 2, 8>}, {transform_indices = @transform_1, window_bounds = array<i64: 8, 2, 8>}, {transform_indices = @transform_2, window_bounds = array<i64: 8, 8, 8>}, {transform_indices = @transform_3, window_bounds = array<i64: 8, 8, 8>}, {transform_indices = @transform_4, window_bounds = array<i64: 8, 2, 16>}]} {
    %c0 = arith.constant 0 : index
    %c0_0 = arith.constant 0 : index
    %c0_1 = arith.constant 0 : index
    %0 = vector.load %arg1[%c0, %c0_0, %c0_1] : memref<8x2x8xbf16, #tpu.memory_space<vmem>>, vector<8x2x8xbf16>
    %c0_2 = arith.constant 0 : index
    %c0_3 = arith.constant 0 : index
    %c0_4 = arith.constant 0 : index
    %1 = vector.load %arg2[%c0_2, %c0_3, %c0_4] : memref<8x2x8xbf16, #tpu.memory_space<vmem>>, vector<8x2x8xbf16>
    %c0_5 = arith.constant 0 : index
    %c0_6 = arith.constant 0 : index
    %c0_7 = arith.constant 0 : index
    %2 = vector.load %arg3[%c0_5, %c0_6, %c0_7] : memref<8x8x8xbf16, #tpu.memory_space<vmem>>, vector<8x8x8xbf16>
    %c0_8 = arith.constant 0 : index
    %c0_9 = arith.constant 0 : index
    %c0_10 = arith.constant 0 : index
    %3 = vector.load %arg4[%c0_8, %c0_9, %c0_10] : memref<8x8x8xbf16, #tpu.memory_space<vmem>>, vector<8x8x8xbf16>
    %cst = arith.constant dense<0.000000e+00> : vector<8x2x8xf32>
    %4 = tpu.matmul %0, %2, %cst {dimension_numbers = #tpu.dot_dimension_numbers<[2], [1], [1], [2], [0, 0, 0, 1, 1, 2], [0], [0]>} : vector<8x2x8xbf16>, vector<8x8x8xbf16>, vector<8x2x8xf32> -> vector<8x2x8xf32>
    %cst_11 = arith.constant dense<0.000000e+00> : vector<8x2x8xf32>
    %5 = tpu.matmul %1, %3, %cst_11 {dimension_numbers = #tpu.dot_dimension_numbers<[2], [1], [1], [2], [0, 0, 0, 1, 1, 2], [0], [0]>} : vector<8x2x8xbf16>, vector<8x8x8xbf16>, vector<8x2x8xf32> -> vector<8x2x8xf32>
    %cst_12 = arith.constant dense<0.000000e+00> : vector<8x2x8xf32>
    %6 = tpu.matmul %0, %3, %cst_12 {dimension_numbers = #tpu.dot_dimension_numbers<[2], [1], [1], [2], [0, 0, 0, 1, 1, 2], [0], [0]>} : vector<8x2x8xbf16>, vector<8x8x8xbf16>, vector<8x2x8xf32> -> vector<8x2x8xf32>
    %cst_13 = arith.constant dense<0.000000e+00> : vector<8x2x8xf32>
    %7 = tpu.matmul %1, %2, %cst_13 {dimension_numbers = #tpu.dot_dimension_numbers<[2], [1], [1], [2], [0, 0, 0, 1, 1, 2], [0], [0]>} : vector<8x2x8xbf16>, vector<8x8x8xbf16>, vector<8x2x8xf32> -> vector<8x2x8xf32>
    %8 = arith.subf %4, %5 : vector<8x2x8xf32>
    %9 = arith.addf %6, %7 : vector<8x2x8xf32>
    %10 = tpu.concatenate %8, %9 in 2 : vector<8x2x8xf32>, vector<8x2x8xf32> -> vector<8x2x16xf32>
    %c0_14 = arith.constant 0 : index
    %c0_15 = arith.constant 0 : index
    %c0_16 = arith.constant 0 : index
    %11 = vector.load %arg5[%c0_14, %c0_15, %c0_16] : memref<8x2x16xf32, #tpu.memory_space<vmem>>, vector<8x2x16xf32>
    tpu.vector_store %arg5[%c0_14, %c0_15, %c0_16], %10 {strides = array<i32>} : memref<8x2x16xf32, #tpu.memory_space<vmem>>, vector<8x2x16xf32>,
    return
  }
  func.func @transform_0(%arg0: i32) -> (i32, i32, i32) {
    %c0_i32 = arith.constant 0 : i32
    %c0_i32_0 = arith.constant 0 : i32
    %c0_i32_1 = arith.constant 0 : i32
    return %arg0, %c0_i32, %c0_i32_0 : i32, i32, i32
  }
  func.func @transform_1(%arg0: i32) -> (i32, i32, i32) {
    %c0_i32 = arith.constant 0 : i32
    %c0_i32_0 = arith.constant 0 : i32
    %c0_i32_1 = arith.constant 0 : i32
    return %arg0, %c0_i32, %c0_i32_0 : i32, i32, i32
  }
  func.func @transform_2(%arg0: i32) -> (i32, i32, i32) {
    %c0_i32 = arith.constant 0 : i32
    %c0_i32_0 = arith.constant 0 : i32
    %c0_i32_1 = arith.constant 0 : i32
    return %arg0, %c0_i32, %c0_i32_0 : i32, i32, i32
  }
  func.func @transform_3(%arg0: i32) -> (i32, i32, i32) {
    %c0_i32 = arith.constant 0 : i32
    %c0_i32_0 = arith.constant 0 : i32
    %c0_i32_1 = arith.constant 0 : i32
    return %arg0, %c0_i32, %c0_i32_0 : i32, i32, i32
  }
  func.func @transform_4(%arg0: i32) -> (i32, i32, i32) {
    %c0_i32 = arith.constant 0 : i32
    %c0_i32_0 = arith.constant 0 : i32
    %c0_i32_1 = arith.constant 0 : i32
    return %arg0, %c0_i32, %c0_i32_0 : i32, i32, i32
  }
}

</mosaic_0001>

<llo_original>
// kernel: tpu_custom_call.1
$region0: #{tpu_custom_call.1}
  #allocation0 [shape = 'u32[]', space=smem, size = 0x4, offset = 0x4, fixed_abs, tag = 'smem constant byte address 0x4 - core index']
  #allocation1 [shape = 'u32[72,128]{1,0:T(1,128)}', space=vmem, size = 0x9000, scoped, tag = 'internal scratch']
  %s0 = inlined_call_operand.vmem [shape: bf16[32,2,8], index: 0, kind: input, shape index: {}]
  %s1 = inlined_call_operand.vmem [shape: bf16[32,2,8], index: 1, kind: input, shape index: {}]
  %s2 = inlined_call_operand.vmem [shape: bf16[32,8,8], index: 2, kind: input, shape index: {}]
  %s3 = inlined_call_operand.vmem [shape: bf16[32,8,8], index: 3, kind: input, shape index: {}]
  %s4 = inlined_call_operand.vmem [shape: f32[32,2,16], index: 4, kind: output, shape index: {}]
  %s5 = sld [smem:[#allocation0]]
  $region49: #{tpu_custom_call.1} parent=0
    _
  %s7 = ssub.s32 1, %s5
  %s8 = scalar_select 0, %s7, %s5
  loop: start=0, step=1, limit=6
  $region2: #{tpu_custom_call.1} parent=0 // loop_pre_header
    _
  $region3: #{tpu_custom_call.1} parent=0 // loop_header
    %s10 = sphi 0, %s14
    %p11 = scmp.ge.s32.totalorder %s10, 6
    %s20 = sphi 0, %s22
    %s23 = sphi 0, %s20
    %s24 = sphi 0, %s23
    %s40 = sphi 0, %s24
    %s46 = sphi 0, %s48
    %s49 = sphi 0, %s46
    %s50 = sphi 0, %s49
    %s66 = sphi 0, %s50
    %s72 = sphi 0, %s74
    %s75 = sphi 0, %s72
    %s76 = sphi 0, %s75
    %s92 = sphi 0, %s76
    %s98 = sphi 0, %s100
    %s101 = sphi 0, %s98
    %s102 = sphi 0, %s101
    %s118 = sphi 0, %s102
    %s124 = sphi 0, %s126
    %s127 = sphi 0, %s124
    %s128 = sphi 0, %s127
    %s144 = sphi 0, %s128
  $region4: #{tpu_custom_call.1} parent=0 // loop_header_branch
    %13 = sbr.rel (%p11) target = $region8
  $region5: #{tpu_custom_call.1} parent=0 // loop_body
    %s15 = ssub.s32 %s10, 1
    %s16 = ssub.s32 %s10, 2
    %s17 = sadd.s32 %s10, 1
    %s18 = ssub.s32 %s10, %s17
    %p19 = scmp.eq.s32.totalorder %s18, 0
    %s21 = sadd.s32 %s20, 1
    %s22 = scalar_select %p19, %s20, %s21
    %p25 = pneg %p19
    %p26 = scmp.eq.s32.totalorder %s10, 3
    %p27 = por %p25, %p26
    %p28 = scmp.ne.s32.totalorder %s20, %s23
    %p29 = scmp.eq.s32.totalorder %s10, 0
    %p30 = por %p28, %p29
    %p31 = scmp.ne.s32.totalorder %s20, %s23
    %p32 = scmp.eq.s32.totalorder %s15, 3
    %p33 = por %p31, %p32
    %p34 = scmp.ne.s32.totalorder %s23, %s24
    %p35 = scmp.eq.s32.totalorder %s15, 0
    %p36 = por %p34, %p35
    %p37 = scmp.ne.s32.totalorder %s23, %s24
    %p38 = scmp.eq.s32.totalorder %s16, 3
    %p39 = por %p37, %p38
    %p41 = scmp.ne.s32.totalorder %s24, %s40
    %p42 = scmp.eq.s32.totalorder %s16, 0
    %p43 = por %p41, %p42
    %s44 = ssub.s32 %s10, %s17
    %p45 = scmp.eq.s32.totalorder %s44, 0
    %s47 = sadd.s32 %s46, 1
    %s48 = scalar_select %p45, %s46, %s47
    %p51 = pneg %p45
    %p52 = scmp.eq.s32.totalorder %s10, 3
    %p53 = por %p51, %p52
    %p54 = scmp.ne.s32.totalorder %s46, %s49
    %p55 = scmp.eq.s32.totalorder %s10, 0
    %p56 = por %p54, %p55
    %p57 = scmp.ne.s32.totalorder %s46, %s49
    %p58 = scmp.eq.s32.totalorder %s15, 3
    %p59 = por %p57, %p58
    %p60 = scmp.ne.s32.totalorder %s49, %s50
    %p61 = scmp.eq.s32.totalorder %s15, 0
    %p62 = por %p60, %p61
    %p63 = scmp.ne.s32.totalorder %s49, %s50
    %p64 = scmp.eq.s32.totalorder %s16, 3
    %p65 = por %p63, %p64
    %p67 = scmp.ne.s32.totalorder %s50, %s66
    %p68 = scmp.eq.s32.totalorder %s16, 0
    %p69 = por %p67, %p68
    %s70 = ssub.s32 %s10, %s17
    %p71 = scmp.eq.s32.totalorder %s70, 0
    %s73 = sadd.s32 %s72, 1
    %s74 = scalar_select %p71, %s72, %s73
    %p77 = pneg %p71
    %p78 = scmp.eq.s32.totalorder %s10, 3
    %p79 = por %p77, %p78
    %p80 = scmp.ne.s32.totalorder %s72, %s75
    %p81 = scmp.eq.s32.totalorder %s10, 0
    %p82 = por %p80, %p81
    %p83 = scmp.ne.s32.totalorder %s72, %s75
    %p84 = scmp.eq.s32.totalorder %s15, 3
    %p85 = por %p83, %p84
    %p86 = scmp.ne.s32.totalorder %s75, %s76
    %p87 = scmp.eq.s32.totalorder %s15, 0
    %p88 = por %p86, %p87
    %p89 = scmp.ne.s32.totalorder %s75, %s76
    %p90 = scmp.eq.s32.totalorder %s16, 3
    %p91 = por %p89, %p90
    %p93 = scmp.ne.s32.totalorder %s76, %s92
    %p94 = scmp.eq.s32.totalorder %s16, 0
    %p95 = por %p93, %p94
    %s96 = ssub.s32 %s10, %s17
    %p97 = scmp.eq.s32.totalorder %s96, 0
    %s99 = sadd.s32 %s98, 1
    %s100 = scalar_select %p97, %s98, %s99
    %p103 = pneg %p97
    %p104 = scmp.eq.s32.totalorder %s10, 3
    %p105 = por %p103, %p104
    %p106 = scmp.ne.s32.totalorder %s98, %s101
    %p107 = scmp.eq.s32.totalorder %s10, 0
    %p108 = por %p106, %p107
    %p109 = scmp.ne.s32.totalorder %s98, %s101
    %p110 = scmp.eq.s32.totalorder %s15, 3
    %p111 = por %p109, %p110
    %p112 = scmp.ne.s32.totalorder %s101, %s102
    %p113 = scmp.eq.s32.totalorder %s15, 0
    %p114 = por %p112, %p113
    %p115 = scmp.ne.s32.totalorder %s101, %s102
    %p116 = scmp.eq.s32.totalorder %s16, 3
    %p117 = por %p115, %p116
    %p119 = scmp.ne.s32.totalorder %s102, %s118
    %p120 = scmp.eq.s32.totalorder %s16, 0
    %p121 = por %p119, %p120
    %s122 = ssub.s32 %s10, %s17
    %p123 = scmp.eq.s32.totalorder %s122, 0
    %s125 = sadd.s32 %s124, 1
    %s126 = scalar_select %p123, %s124, %s125
    %p129 = pneg %p123
    %p130 = scmp.eq.s32.totalorder %s10, 3
    %p131 = por %p129, %p130
    %p132 = scmp.ne.s32.totalorder %s124, %s127
    %p133 = scmp.eq.s32.totalorder %s10, 0
    %p134 = por %p132, %p133
    %p135 = scmp.ne.s32.totalorder %s124, %s127
    %p136 = scmp.eq.s32.totalorder %s15, 3
    %p137 = por %p135, %p136
    %p138 = scmp.ne.s32.totalorder %s127, %s128
    %p139 = scmp.eq.s32.totalorder %s15, 0
    %p140 = por %p138, %p139
    %p141 = scmp.ne.s32.totalorder %s127, %s128
    %p142 = scmp.eq.s32.totalorder %s16, 3
    %p143 = por %p141, %p142
    %p145 = scmp.ne.s32.totalorder %s128, %s144
    %p146 = scmp.eq.s32.totalorder %s16, 0
    %p147 = por %p145, %p146
    %p148 = scmp.le.s32.totalorder 1, %s10
    %p149 = scmp.lt.s32.totalorder %s10, 5
    %p150 = pnand %p148, %p149
    %p151 = pneg %p150
    // Predicated region
    $region9: #{tpu_custom_call.1} parent=5 // pred_check
      _
    $region10: #{tpu_custom_call.1} parent=5 // pred_check_branch
      %153 = sbr.rel (%p150) target = $region12
    $region11: #{tpu_custom_call.1} parent=5 // pred_region
      %s154 = ssub.s32 %s10, 1
    $region12: #{tpu_custom_call.1} parent=5 // pred_fallthru
      _
    %p155 = scmp.lt.s32.totalorder %s10, 4
    // Predicated region
    $region13: #{tpu_custom_call.1} parent=5 // pred_check
      %p156 = pneg %p155
    $region14: #{tpu_custom_call.1} parent=5 // pred_check_branch
      %158 = sbr.rel (%p156) target = $region16
    $region15: #{tpu_custom_call.1} parent=5 // pred_region
      // Predicated region
      $region17: #{tpu_custom_call.1} parent=15 // pred_check
        %p159 = pneg %p30
      $region18: #{tpu_custom_call.1} parent=15 // pred_check_branch
        %161 = sbr.rel (%p159) target = $region20
      $region19: #{tpu_custom_call.1} parent=15 // pred_region
        %s162 = smul.u32 8, %s10
        %p163 = scmp.lt.s32.totalorder %s162, 31
        %s164 = scalar_select %p163, %s162, 31
        %s165 = scalar_lea.vmem %s0, %s164
        %s166 = smul.u32 8, %s10
      $region20: #{tpu_custom_call.1} parent=15 // pred_fallthru
        _
      // Predicated region
      $region21: #{tpu_custom_call.1} parent=15 // pred_check
        %p167 = pneg %p56
      $region22: #{tpu_custom_call.1} parent=15 // pred_check_branch
        %169 = sbr.rel (%p167) target = $region24
      $region23: #{tpu_custom_call.1} parent=15 // pred_region
        %s170 = smul.u32 8, %s10
        %p171 = scmp.lt.s32.totalorder %s170, 31
        %s172 = scalar_select %p171, %s170, 31
        %s173 = scalar_lea.vmem %s1, %s172
        %s174 = smul.u32 8, %s10
      $region24: #{tpu_custom_call.1} parent=15 // pred_fallthru
        _
      // Predicated region
      $region25: #{tpu_custom_call.1} parent=15 // pred_check
        %p175 = pneg %p82
      $region26: #{tpu_custom_call.1} parent=15 // pred_check_branch
        %177 = sbr.rel (%p175) target = $region28
      $region27: #{tpu_custom_call.1} parent=15 // pred_region
        %s178 = smul.u32 8, %s10
        %p179 = scmp.lt.s32.totalorder %s178, 31
        %s180 = scalar_select %p179, %s178, 31
        %s181 = smul.addr %s180, 4
        %s182 = scalar_lea.vmem %s2, %s181
        %s183 = smul.u32 8, %s10
      $region28: #{tpu_custom_call.1} parent=15 // pred_fallthru
        _
      // Predicated region
      $region29: #{tpu_custom_call.1} parent=15 // pred_check
        %p184 = pneg %p108
      $region30: #{tpu_custom_call.1} parent=15 // pred_check_branch
        %186 = sbr.rel (%p184) target = $region32
      $region31: #{tpu_custom_call.1} parent=15 // pred_region
        %s187 = smul.u32 8, %s10
        %p188 = scmp.lt.s32.totalorder %s187, 31
        %s189 = scalar_select %p188, %s187, 31
        %s190 = smul.addr %s189, 4
        %s191 = scalar_lea.vmem %s3, %s190
        %s192 = smul.u32 8, %s10
      $region32: #{tpu_custom_call.1} parent=15 // pred_fallthru
        _
    $region16: #{tpu_custom_call.1} parent=5 // pred_fallthru
      _
    %p193 = scmp.le.s32.totalorder 1, %s10
    %p194 = scmp.lt.s32.totalorder %s10, 5
    %p195 = pnand %p193, %p194
    %p196 = pneg %p195
    // Predicated region
    $region33: #{tpu_custom_call.1} parent=5 // pred_check
      _
    $region34: #{tpu_custom_call.1} parent=5 // pred_check_branch
      %198 = sbr.rel (%p195) target = $region36
    $region35: #{tpu_custom_call.1} parent=5 // pred_region
      %s199 = ssub.s32 %s10, 1
      %s200 = smul.u32 8, %s15
      %p201 = scmp.lt.s32.totalorder %s200, 31
      %s202 = scalar_select %p201, %s200, 31
      %s203 = scalar_lea.vmem %s0, %s202
      %p204 = pneg %p36
      %p205 = pneg %p33
      %s206 = smul.u32 8, %s15
      %p207 = scmp.lt.s32.totalorder %s206, 31
      %s208 = scalar_select %p207, %s206, 31
      %s209 = scalar_lea.vmem %s1, %s208
      %p210 = pneg %p62
      %p211 = pneg %p59
      %s212 = smul.u32 8, %s15
      %p213 = scmp.lt.s32.totalorder %s212, 31
      %s214 = scalar_select %p213, %s212, 31
      %s215 = smul.addr %s214, 4
      %s216 = scalar_lea.vmem %s2, %s215
      %p217 = pneg %p88
      %p218 = pneg %p85
      %s219 = smul.u32 8, %s15
      %p220 = scmp.lt.s32.totalorder %s219, 31
      %s221 = scalar_select %p220, %s219, 31
      %s222 = smul.addr %s221, 4
      %s223 = scalar_lea.vmem %s3, %s222
      %p224 = pneg %p114
      %p225 = pneg %p111
      %p226 = pneg %p140
      %p227 = pneg %p137
      %s228 = smul.u32 8, %s15
      %p229 = scmp.lt.s32.totalorder %s228, 31
      %s230 = scalar_select %p229, %s228, 31
      %s231 = smul.addr %s230, 2
      %s232 = scalar_lea.vmem %s4, %s231
      %s233 = smul.u32 8, %s15
      %p234 = scmp.lt.s32.totalorder %s233, 31
      %s235 = scalar_select %p234, %s233, 31
      %s236 = scalar_lea.vmem %s0, %s235
      %s237 = smul.u32 8, %s15
      %s238 = smul.u32 8, %s15
      %p239 = scmp.lt.s32.totalorder %s238, 31
      %s240 = scalar_select %p239, %s238, 31
      %s241 = scalar_lea.vmem %s1, %s240
      %s242 = smul.u32 8, %s15
      %s243 = smul.u32 8, %s15
      %p244 = scmp.lt.s32.totalorder %s243, 31
      %s245 = scalar_select %p244, %s243, 31
      %s246 = smul.addr %s245, 4
      %s247 = scalar_lea.vmem %s2, %s246
      %s248 = smul.u32 8, %s15
      %s249 = smul.u32 8, %s15
      %p250 = scmp.lt.s32.totalorder %s249, 31
      %s251 = scalar_select %p250, %s249, 31
      %s252 = smul.addr %s251, 4
      %s253 = scalar_lea.vmem %s3, %s252
      %s254 = smul.u32 8, %s15
      %s255 = smul.u32 8, %s15
      %p256 = scmp.lt.s32.totalorder %s255, 31
      %s257 = scalar_select %p256, %s255, 31
      %s258 = smul.addr %s257, 2
      %s259 = scalar_lea.vmem %s4, %s258
      %s260 = smul.u32 8, %s15
      %v262 = vld [vmem:[%s236] sm:$0x1]
      %v263 = vld [vmem:[%s236 + $0x1] sm:$0x1]
      %v264 = vld [vmem:[%s236 + $0x2] sm:$0x1]
      %v265 = vld [vmem:[%s236 + $0x3] sm:$0x1]
      %v266 = vld [vmem:[%s236 + $0x4] sm:$0x1]
      %v267 = vld [vmem:[%s236 + $0x5] sm:$0x1]
      %v268 = vld [vmem:[%s236 + $0x6] sm:$0x1]
      %v269 = vld [vmem:[%s236 + $0x7] sm:$0x1]
      %v270 = vld [vmem:[%s241] sm:$0x1]
      %v271 = vld [vmem:[%s241 + $0x1] sm:$0x1]
      %v272 = vld [vmem:[%s241 + $0x2] sm:$0x1]
      %v273 = vld [vmem:[%s241 + $0x3] sm:$0x1]
      %v274 = vld [vmem:[%s241 + $0x4] sm:$0x1]
      %v275 = vld [vmem:[%s241 + $0x5] sm:$0x1]
      %v276 = vld [vmem:[%s241 + $0x6] sm:$0x1]
      %v277 = vld [vmem:[%s241 + $0x7] sm:$0x1]
      %v278 = vld [vmem:[%s247] sm:$0xf]
      %v279 = vld [vmem:[%s247 + $0x4] sm:$0xf]
      %v280 = vld [vmem:[%s247 + $0x8] sm:$0xf]
      %v281 = vld [vmem:[%s247 + $0xc] sm:$0xf]
      %v282 = vld [vmem:[%s247 + $0x10] sm:$0xf]
      %v283 = vld [vmem:[%s247 + $0x14] sm:$0xf]
      %v284 = vld [vmem:[%s247 + $0x18] sm:$0xf]
      %v285 = vld [vmem:[%s247 + $0x1c] sm:$0xf]
      %v286 = vld [vmem:[%s253] sm:$0xf]
      %v287 = vld [vmem:[%s253 + $0x4] sm:$0xf]
      %v288 = vld [vmem:[%s253 + $0x8] sm:$0xf]
      %v289 = vld [vmem:[%s253 + $0xc] sm:$0xf]
      %v290 = vld [vmem:[%s253 + $0x10] sm:$0xf]
      %v291 = vld [vmem:[%s253 + $0x14] sm:$0xf]
      %v292 = vld [vmem:[%s253 + $0x18] sm:$0xf]
      %v293 = vld [vmem:[%s253 + $0x1c] sm:$0xf]
      %vm294 = vcmask 64512
      %v296 = vsel %vm294, %v262, 0
      %vm298 = vcmask 1043456
      %v300 = vsel %vm298, %v278, 0
      %302 = vmatpush.bf16.msra.mxu0 0
      %303 = vmatpush.bf16.msra.mxu0 0
      %304 = vmatpush.bf16.msra.mxu0 0
      %305 = vmatpush.bf16.msra.mxu0 0
      %306 = vmatpush.bf16.msra.mxu0 0
      %307 = vmatpush.bf16.msra.mxu0 0
      %308 = vmatpush.bf16.msra.mxu0 0
      %309 = vmatpush.bf16.msra.mxu0 %v300
      %310 = vmatmul.bf16.gmra.mxu0 %v296
      %v311 = vpop.f32.mrf.mxu0
      %v312 = vadd.f32 0.0, %v311
      %v313 = vpop.f32.mrf.mxu0
      %314 = vdwg.mxu0
      %v316 = vsel %vm294, %v263, 0
      %v319 = vsel %vm298, %v279, 0
      %321 = vmatpush.bf16.msra.mxu0 0
      %322 = vmatpush.bf16.msra.mxu0 0
      %323 = vmatpush.bf16.msra.mxu0 0
      %324 = vmatpush.bf16.msra.mxu0 0
      %325 = vmatpush.bf16.msra.mxu0 0
      %326 = vmatpush.bf16.msra.mxu0 0
      %327 = vmatpush.bf16.msra.mxu0 0
      %328 = vmatpush.bf16.msra.mxu0 %v319
      %329 = vmatmul.bf16.gmra.mxu0 %v316
      %v330 = vpop.f32.mrf.mxu0
      %v331 = vadd.f32 0.0, %v330
      %v332 = vpop.f32.mrf.mxu0
      %333 = vdwg.mxu0
      %v335 = vsel %vm294, %v264, 0
      %v338 = vsel %vm298, %v280, 0
      %340 = vmatpush.bf16.msra.mxu0 0
      %341 = vmatpush.bf16.msra.mxu0 0
      %342 = vmatpush.bf16.msra.mxu0 0
      %343 = vmatpush.bf16.msra.mxu0 0
      %344 = vmatpush.bf16.msra.mxu0 0
      %345 = vmatpush.bf16.msra.mxu0 0
      %346 = vmatpush.bf16.msra.mxu0 0
      %347 = vmatpush.bf16.msra.mxu0 %v338
      %348 = vmatmul.bf16.gmra.mxu0 %v335
      %v349 = vpop.f32.mrf.mxu0
      %v350 = vadd.f32 0.0, %v349
      %v351 = vpop.f32.mrf.mxu0
      %352 = vdwg.mxu0
      %v354 = vsel %vm294, %v265, 0
      %v357 = vsel %vm298, %v281, 0
      %359 = vmatpush.bf16.msra.mxu0 0
      %360 = vmatpush.bf16.msra.mxu0 0
      %361 = vmatpush.bf16.msra.mxu0 0
      %362 = vmatpush.bf16.msra.mxu0 0
      %363 = vmatpush.bf16.msra.mxu0 0
      %364 = vmatpush.bf16.msra.mxu0 0
      %365 = vmatpush.bf16.msra.mxu0 0
      %366 = vmatpush.bf16.msra.mxu0 %v357
      %367 = vmatmul.bf16.gmra.mxu0 %v354
      %v368 = vpop.f32.mrf.mxu0
      %v369 = vadd.f32 0.0, %v368
      %v370 = vpop.f32.mrf.mxu0
      %371 = vdwg.mxu0
      %v373 = vsel %vm294, %v266, 0
      %v376 = vsel %vm298, %v282, 0
      %378 = vmatpush.bf16.msra.mxu0 0
      %379 = vmatpush.bf16.msra.mxu0 0
      %380 = vmatpush.bf16.msra.mxu0 0
      %381 = vmatpush.bf16.msra.mxu0 0
      %382 = vmatpush.bf16.msra.mxu0 0
      %383 = vmatpush.bf16.msra.mxu0 0
      %384 = vmatpush.bf16.msra.mxu0 0
      %385 = vmatpush.bf16.msra.mxu0 %v376
      %386 = vmatmul.bf16.gmra.mxu0 %v373
      %v387 = vpop.f32.mrf.mxu0
      %v388 = vadd.f32 0.0, %v387
      %v389 = vpop.f32.mrf.mxu0
      %390 = vdwg.mxu0
      %v392 = vsel %vm294, %v267, 0
      %v395 = vsel %vm298, %v283, 0
      %397 = vmatpush.bf16.msra.mxu0 0
      %398 = vmatpush.bf16.msra.mxu0 0
      %399 = vmatpush.bf16.msra.mxu0 0
      %400 = vmatpush.bf16.msra.mxu0 0
      %401 = vmatpush.bf16.msra.mxu0 0
      %402 = vmatpush.bf16.msra.mxu0 0
      %403 = vmatpush.bf16.msra.mxu0 0
      %404 = vmatpush.bf16.msra.mxu0 %v395
      %405 = vmatmul.bf16.gmra.mxu0 %v392
      %v406 = vpop.f32.mrf.mxu0
      %v407 = vadd.f32 0.0, %v406
      %v408 = vpop.f32.mrf.mxu0
      %409 = vdwg.mxu0
      %v411 = vsel %vm294, %v268, 0
      %v414 = vsel %vm298, %v284, 0
      %416 = vmatpush.bf16.msra.mxu0 0
      %417 = vmatpush.bf16.msra.mxu0 0
      %418 = vmatpush.bf16.msra.mxu0 0
      %419 = vmatpush.bf16.msra.mxu0 0
      %420 = vmatpush.bf16.msra.mxu0 0
      %421 = vmatpush.bf16.msra.mxu0 0
      %422 = vmatpush.bf16.msra.mxu0 0
      %423 = vmatpush.bf16.msra.mxu0 %v414
      %424 = vmatmul.bf16.gmra.mxu0 %v411
      %v425 = vpop.f32.mrf.mxu0
      %v426 = vadd.f32 0.0, %v425
      %v427 = vpop.f32.mrf.mxu0
      %428 = vdwg.mxu0
      %v430 = vsel %vm294, %v269, 0
      %v433 = vsel %vm298, %v285, 0
      %435 = vmatpush.bf16.msra.mxu0 0
      %436 = vmatpush.bf16.msra.mxu0 0
      %437 = vmatpush.bf16.msra.mxu0 0
      %438 = vmatpush.bf16.msra.mxu0 0
      %439 = vmatpush.bf16.msra.mxu0 0
      %440 = vmatpush.bf16.msra.mxu0 0
      %441 = vmatpush.bf16.msra.mxu0 0
      %442 = vmatpush.bf16.msra.mxu0 %v433
      %443 = vmatmul.bf16.gmra.mxu0 %v430
      %v444 = vpop.f32.mrf.mxu0
      %v445 = vadd.f32 0.0, %v444
      %v446 = vpop.f32.mrf.mxu0
      %447 = vdwg.mxu0
      %v449 = vsel %vm294, %v270, 0
      %v452 = vsel %vm298, %v286, 0
      %454 = vmatpush.bf16.msra.mxu0 0
      %455 = vmatpush.bf16.msra.mxu0 0
      %456 = vmatpush.bf16.msra.mxu0 0
      %457 = vmatpush.bf16.msra.mxu0 0
      %458 = vmatpush.bf16.msra.mxu0 0
      %459 = vmatpush.bf16.msra.mxu0 0
      %460 = vmatpush.bf16.msra.mxu0 0
      %461 = vmatpush.bf16.msra.mxu0 %v452
      %462 = vmatmul.bf16.gmra.mxu0 %v449
      %v463 = vpop.f32.mrf.mxu0
      %v464 = vadd.f32 0.0, %v463
      %v465 = vpop.f32.mrf.mxu0
      %466 = vdwg.mxu0
      %v468 = vsel %vm294, %v271, 0
      %v471 = vsel %vm298, %v287, 0
      %473 = vmatpush.bf16.msra.mxu0 0
      %474 = vmatpush.bf16.msra.mxu0 0
      %475 = vmatpush.bf16.msra.mxu0 0
      %476 = vmatpush.bf16.msra.mxu0 0
      %477 = vmatpush.bf16.msra.mxu0 0
      %478 = vmatpush.bf16.msra.mxu0 0
      %479 = vmatpush.bf16.msra.mxu0 0
      %480 = vmatpush.bf16.msra.mxu0 %v471
      %481 = vmatmul.bf16.gmra.mxu0 %v468
      %v482 = vpop.f32.mrf.mxu0
      %v483 = vadd.f32 0.0, %v482
      %v484 = vpop.f32.mrf.mxu0
      %485 = vdwg.mxu0
      %v487 = vsel %vm294, %v272, 0
      %v490 = vsel %vm298, %v288, 0
      %492 = vmatpush.bf16.msra.mxu0 0
      %493 = vmatpush.bf16.msra.mxu0 0
      %494 = vmatpush.bf16.msra.mxu0 0
      %495 = vmatpush.bf16.msra.mxu0 0
      %496 = vmatpush.bf16.msra.mxu0 0
      %497 = vmatpush.bf16.msra.mxu0 0
      %498 = vmatpush.bf16.msra.mxu0 0
      %499 = vmatpush.bf16.msra.mxu0 %v490
      %500 = vmatmul.bf16.gmra.mxu0 %v487
      %v501 = vpop.f32.mrf.mxu0
      %v502 = vadd.f32 0.0, %v501
      %v503 = vpop.f32.mrf.mxu0
      %504 = vdwg.mxu0
      %v506 = vsel %vm294, %v273, 0
      %v509 = vsel %vm298, %v289, 0
      %511 = vmatpush.bf16.msra.mxu0 0
      %512 = vmatpush.bf16.msra.mxu0 0
      %513 = vmatpush.bf16.msra.mxu0 0
      %514 = vmatpush.bf16.msra.mxu0 0
      %515 = vmatpush.bf16.msra.mxu0 0
      %516 = vmatpush.bf16.msra.mxu0 0
      %517 = vmatpush.bf16.msra.mxu0 0
      %518 = vmatpush.bf16.msra.mxu0 %v509
      %519 = vmatmul.bf16.gmra.mxu0 %v506
      %v520 = vpop.f32.mrf.mxu0
      %v521 = vadd.f32 0.0, %v520
      %v522 = vpop.f32.mrf.mxu0
      %523 = vdwg.mxu0
      %v525 = vsel %vm294, %v274, 0
      %v528 = vsel %vm298, %v290, 0
      %530 = vmatpush.bf16.msra.mxu0 0
      %531 = vmatpush.bf16.msra.mxu0 0
      %532 = vmatpush.bf16.msra.mxu0 0
      %533 = vmatpush.bf16.msra.mxu0 0
      %534 = vmatpush.bf16.msra.mxu0 0
      %535 = vmatpush.bf16.msra.mxu0 0
      %536 = vmatpush.bf16.msra.mxu0 0
      %537 = vmatpush.bf16.msra.mxu0 %v528
      %538 = vmatmul.bf16.gmra.mxu0 %v525
      %v539 = vpop.f32.mrf.mxu0
      %v540 = vadd.f32 0.0, %v539
      %v541 = vpop.f32.mrf.mxu0
      %542 = vdwg.mxu0
      %v544 = vsel %vm294, %v275, 0
      %v547 = vsel %vm298, %v291, 0
      %549 = vmatpush.bf16.msra.mxu0 0
      %550 = vmatpush.bf16.msra.mxu0 0
      %551 = vmatpush.bf16.msra.mxu0 0
      %552 = vmatpush.bf16.msra.mxu0 0
      %553 = vmatpush.bf16.msra.mxu0 0
      %554 = vmatpush.bf16.msra.mxu0 0
      %555 = vmatpush.bf16.msra.mxu0 0
      %556 = vmatpush.bf16.msra.mxu0 %v547
      %557 = vmatmul.bf16.gmra.mxu0 %v544
      %v558 = vpop.f32.mrf.mxu0
      %v559 = vadd.f32 0.0, %v558
      %v560 = vpop.f32.mrf.mxu0
      %561 = vdwg.mxu0
      %v563 = vsel %vm294, %v276, 0
      %v566 = vsel %vm298, %v292, 0
      %568 = vmatpush.bf16.msra.mxu0 0
      %569 = vmatpush.bf16.msra.mxu0 0
      %570 = vmatpush.bf16.msra.mxu0 0
      %571 = vmatpush.bf16.msra.mxu0 0
      %572 = vmatpush.bf16.msra.mxu0 0
      %573 = vmatpush.bf16.msra.mxu0 0
      %574 = vmatpush.bf16.msra.mxu0 0
      %575 = vmatpush.bf16.msra.mxu0 %v566
      %576 = vmatmul.bf16.gmra.mxu0 %v563
      %v577 = vpop.f32.mrf.mxu0
      %v578 = vadd.f32 0.0, %v577
      %v579 = vpop.f32.mrf.mxu0
      %580 = vdwg.mxu0
      %v582 = vsel %vm294, %v277, 0
      %v585 = vsel %vm298, %v293, 0
      %587 = vmatpush.bf16.msra.mxu0 0
      %588 = vmatpush.bf16.msra.mxu0 0
      %589 = vmatpush.bf16.msra.mxu0 0
      %590 = vmatpush.bf16.msra.mxu0 0
      %591 = vmatpush.bf16.msra.mxu0 0
      %592 = vmatpush.bf16.msra.mxu0 0
      %593 = vmatpush.bf16.msra.mxu0 0
      %594 = vmatpush.bf16.msra.mxu0 %v585
      %595 = vmatmul.bf16.gmra.mxu0 %v582
      %v596 = vpop.f32.mrf.mxu0
      %v597 = vadd.f32 0.0, %v596
      %v598 = vpop.f32.mrf.mxu0
      %599 = vdwg.mxu0
      %600 = vmatpush.bf16.msra.mxu0 0
      %601 = vmatpush.bf16.msra.mxu0 0
      %602 = vmatpush.bf16.msra.mxu0 0
      %603 = vmatpush.bf16.msra.mxu0 0
      %604 = vmatpush.bf16.msra.mxu0 0
      %605 = vmatpush.bf16.msra.mxu0 0
      %606 = vmatpush.bf16.msra.mxu0 0
      %607 = vmatpush.bf16.msra.mxu0 %v300
      %608 = vmatmul.bf16.gmra.mxu0 %v449
      %v609 = vpop.f32.mrf.mxu0
      %v610 = vadd.f32 0.0, %v609
      %v611 = vpop.f32.mrf.mxu0
      %612 = vdwg.mxu0
      %613 = vmatpush.bf16.msra.mxu0 0
      %614 = vmatpush.bf16.msra.mxu0 0
      %615 = vmatpush.bf16.msra.mxu0 0
      %616 = vmatpush.bf16.msra.mxu0 0
      %617 = vmatpush.bf16.msra.mxu0 0
      %618 = vmatpush.bf16.msra.mxu0 0
      %619 = vmatpush.bf16.msra.mxu0 0
      %620 = vmatpush.bf16.msra.mxu0 %v319
      %621 = vmatmul.bf16.gmra.mxu0 %v468
      %v622 = vpop.f32.mrf.mxu0
      %v623 = vadd.f32 0.0, %v622
      %v624 = vpop.f32.mrf.mxu0
      %625 = vdwg.mxu0
      %626 = vmatpush.bf16.msra.mxu0 0
      %627 = vmatpush.bf16.msra.mxu0 0
      %628 = vmatpush.bf16.msra.mxu0 0
      %629 = vmatpush.bf16.msra.mxu0 0
      %630 = vmatpush.bf16.msra.mxu0 0
      %631 = vmatpush.bf16.msra.mxu0 0
      %632 = vmatpush.bf16.msra.mxu0 0
      %633 = vmatpush.bf16.msra.mxu0 %v338
      %634 = vmatmul.bf16.gmra.mxu0 %v487
      %v635 = vpop.f32.mrf.mxu0
      %v636 = vadd.f32 0.0, %v635
      %v637 = vpop.f32.mrf.mxu0
      %638 = vdwg.mxu0
      %639 = vmatpush.bf16.msra.mxu0 0
      %640 = vmatpush.bf16.msra.mxu0 0
      %641 = vmatpush.bf16.msra.mxu0 0
      %642 = vmatpush.bf16.msra.mxu0 0
      %643 = vmatpush.bf16.msra.mxu0 0
      %644 = vmatpush.bf16.msra.mxu0 0
      %645 = vmatpush.bf16.msra.mxu0 0
      %646 = vmatpush.bf16.msra.mxu0 %v357
      %647 = vmatmul.bf16.gmra.mxu0 %v506
      %v648 = vpop.f32.mrf.mxu0
      %v649 = vadd.f32 0.0, %v648
      %v650 = vpop.f32.mrf.mxu0
      %651 = vdwg.mxu0
      %652 = vmatpush.bf16.msra.mxu0 0
      %653 = vmatpush.bf16.msra.mxu0 0
      %654 = vmatpush.bf16.msra.mxu0 0
      %655 = vmatpush.bf16.msra.mxu0 0
      %656 = vmatpush.bf16.msra.mxu0 0
      %657 = vmatpush.bf16.msra.mxu0 0
      %658 = vmatpush.bf16.msra.mxu0 0
      %659 = vmatpush.bf16.msra.mxu0 %v376
      %660 = vmatmul.bf16.gmra.mxu0 %v525
      %v661 = vpop.f32.mrf.mxu0
      %v662 = vadd.f32 0.0, %v661
      %v663 = vpop.f32.mrf.mxu0
      %664 = vdwg.mxu0
      %665 = vmatpush.bf16.msra.mxu0 0
      %666 = vmatpush.bf16.msra.mxu0 0
      %667 = vmatpush.bf16.msra.mxu0 0
      %668 = vmatpush.bf16.msra.mxu0 0
      %669 = vmatpush.bf16.msra.mxu0 0
      %670 = vmatpush.bf16.msra.mxu0 0
      %671 = vmatpush.bf16.msra.mxu0 0
      %672 = vmatpush.bf16.msra.mxu0 %v395
      %673 = vmatmul.bf16.gmra.mxu0 %v544
      %v674 = vpop.f32.mrf.mxu0
      %v675 = vadd.f32 0.0, %v674
      %v676 = vpop.f32.mrf.mxu0
      %677 = vdwg.mxu0
      %678 = vmatpush.bf16.msra.mxu0 0
      %679 = vmatpush.bf16.msra.mxu0 0
      %680 = vmatpush.bf16.msra.mxu0 0
      %681 = vmatpush.bf16.msra.mxu0 0
      %682 = vmatpush.bf16.msra.mxu0 0
      %683 = vmatpush.bf16.msra.mxu0 0
      %684 = vmatpush.bf16.msra.mxu0 0
      %685 = vmatpush.bf16.msra.mxu0 %v414
      %686 = vmatmul.bf16.gmra.mxu0 %v563
      %v687 = vpop.f32.mrf.mxu0
      %v688 = vadd.f32 0.0, %v687
      %v689 = vpop.f32.mrf.mxu0
      %690 = vdwg.mxu0
      %691 = vmatpush.bf16.msra.mxu0 0
      %692 = vmatpush.bf16.msra.mxu0 0
      %693 = vmatpush.bf16.msra.mxu0 0
      %694 = vmatpush.bf16.msra.mxu0 0
      %695 = vmatpush.bf16.msra.mxu0 0
      %696 = vmatpush.bf16.msra.mxu0 0
      %697 = vmatpush.bf16.msra.mxu0 0
      %698 = vmatpush.bf16.msra.mxu0 %v433
      %699 = vmatmul.bf16.gmra.mxu0 %v582
      %v700 = vpop.f32.mrf.mxu0
      %v701 = vadd.f32 0.0, %v700
      %v702 = vpop.f32.mrf.mxu0
      %703 = vdwg.mxu0
      %v704 = vsub.f32 %v312, %v464
      %v705 = vsub.f32 %v331, %v483
      %v706 = vsub.f32 %v350, %v502
      %v707 = vsub.f32 %v369, %v521
      %v708 = vsub.f32 %v388, %v540
      %v709 = vsub.f32 %v407, %v559
      %v710 = vsub.f32 %v426, %v578
      %v711 = vsub.f32 %v445, %v597
      %712 = vmatpush.bf16.msra.mxu0 0
      %713 = vmatpush.bf16.msra.mxu0 0
      %714 = vmatpush.bf16.msra.mxu0 0
      %715 = vmatpush.bf16.msra.mxu0 0
      %716 = vmatpush.bf16.msra.mxu0 0
      %717 = vmatpush.bf16.msra.mxu0 0
      %718 = vmatpush.bf16.msra.mxu0 0
      %719 = vmatpush.bf16.msra.mxu0 %v452
      %720 = vmatmul.bf16.gmra.mxu0 %v296
      %v721 = vpop.f32.mrf.mxu0
      %v722 = vadd.f32 %v610, %v721
      %v723 = vpop.f32.mrf.mxu0
      %724 = vdwg.mxu0
      %725 = vmatpush.bf16.msra.mxu0 0
      %726 = vmatpush.bf16.msra.mxu0 0
      %727 = vmatpush.bf16.msra.mxu0 0
      %728 = vmatpush.bf16.msra.mxu0 0
      %729 = vmatpush.bf16.msra.mxu0 0
      %730 = vmatpush.bf16.msra.mxu0 0
      %731 = vmatpush.bf16.msra.mxu0 0
      %732 = vmatpush.bf16.msra.mxu0 %v471
      %733 = vmatmul.bf16.gmra.mxu0 %v316
      %v734 = vpop.f32.mrf.mxu0
      %v735 = vadd.f32 %v623, %v734
      %v736 = vpop.f32.mrf.mxu0
      %737 = vdwg.mxu0
      %738 = vmatpush.bf16.msra.mxu0 0
      %739 = vmatpush.bf16.msra.mxu0 0
      %740 = vmatpush.bf16.msra.mxu0 0
      %741 = vmatpush.bf16.msra.mxu0 0
      %742 = vmatpush.bf16.msra.mxu0 0
      %743 = vmatpush.bf16.msra.mxu0 0
      %744 = vmatpush.bf16.msra.mxu0 0
      %745 = vmatpush.bf16.msra.mxu0 %v490
      %746 = vmatmul.bf16.gmra.mxu0 %v335
      %v747 = vpop.f32.mrf.mxu0
      %v748 = vadd.f32 %v636, %v747
      %v749 = vpop.f32.mrf.mxu0
      %750 = vdwg.mxu0
      %751 = vmatpush.bf16.msra.mxu0 0
      %752 = vmatpush.bf16.msra.mxu0 0
      %753 = vmatpush.bf16.msra.mxu0 0
      %754 = vmatpush.bf16.msra.mxu0 0
      %755 = vmatpush.bf16.msra.mxu0 0
      %756 = vmatpush.bf16.msra.mxu0 0
      %757 = vmatpush.bf16.msra.mxu0 0
      %758 = vmatpush.bf16.msra.mxu0 %v509
      %759 = vmatmul.bf16.gmra.mxu0 %v354
      %v760 = vpop.f32.mrf.mxu0
      %v761 = vadd.f32 %v649, %v760
      %v762 = vpop.f32.mrf.mxu0
      %763 = vdwg.mxu0
      %764 = vmatpush.bf16.msra.mxu0 0
      %765 = vmatpush.bf16.msra.mxu0 0
      %766 = vmatpush.bf16.msra.mxu0 0
      %767 = vmatpush.bf16.msra.mxu0 0
      %768 = vmatpush.bf16.msra.mxu0 0
      %769 = vmatpush.bf16.msra.mxu0 0
      %770 = vmatpush.bf16.msra.mxu0 0
      %771 = vmatpush.bf16.msra.mxu0 %v528
      %772 = vmatmul.bf16.gmra.mxu0 %v373
      %v773 = vpop.f32.mrf.mxu0
      %v774 = vadd.f32 %v662, %v773
      %v775 = vpop.f32.mrf.mxu0
      %776 = vdwg.mxu0
      %777 = vmatpush.bf16.msra.mxu0 0
      %778 = vmatpush.bf16.msra.mxu0 0
      %779 = vmatpush.bf16.msra.mxu0 0
      %780 = vmatpush.bf16.msra.mxu0 0
      %781 = vmatpush.bf16.msra.mxu0 0
      %782 = vmatpush.bf16.msra.mxu0 0
      %783 = vmatpush.bf16.msra.mxu0 0
      %784 = vmatpush.bf16.msra.mxu0 %v547
      %785 = vmatmul.bf16.gmra.mxu0 %v392
      %v786 = vpop.f32.mrf.mxu0
      %v787 = vadd.f32 %v675, %v786
      %v788 = vpop.f32.mrf.mxu0
      %789 = vdwg.mxu0
      %790 = vmatpush.bf16.msra.mxu0 0
      %791 = vmatpush.bf16.msra.mxu0 0
      %792 = vmatpush.bf16.msra.mxu0 0
      %793 = vmatpush.bf16.msra.mxu0 0
      %794 = vmatpush.bf16.msra.mxu0 0
      %795 = vmatpush.bf16.msra.mxu0 0
      %796 = vmatpush.bf16.msra.mxu0 0
      %797 = vmatpush.bf16.msra.mxu0 %v566
      %798 = vmatmul.bf16.gmra.mxu0 %v411
      %v799 = vpop.f32.mrf.mxu0
      %v800 = vadd.f32 %v688, %v799
      %v801 = vpop.f32.mrf.mxu0
      %802 = vdwg.mxu0
      %803 = vmatpush.bf16.msra.mxu0 0
      %804 = vmatpush.bf16.msra.mxu0 0
      %805 = vmatpush.bf16.msra.mxu0 0
      %806 = vmatpush.bf16.msra.mxu0 0
      %807 = vmatpush.bf16.msra.mxu0 0
      %808 = vmatpush.bf16.msra.mxu0 0
      %809 = vmatpush.bf16.msra.mxu0 0
      %810 = vmatpush.bf16.msra.mxu0 %v585
      %811 = vmatmul.bf16.gmra.mxu0 %v430
      %v812 = vpop.f32.mrf.mxu0
      %v813 = vadd.f32 %v701, %v812
      %v814 = vpop.f32.mrf.mxu0
      %815 = vdwg.mxu0
      %824 = vrot.lane.b32.xlu0 %v722, 8
      %v825 = vpop.permute.xlu0 %824
      %826 = vrot.lane.b32.xlu0 %v735, 8
      %v827 = vpop.permute.xlu0 %826
      %828 = vrot.lane.b32.xlu0 %v748, 8
      %v829 = vpop.permute.xlu0 %828
      %830 = vrot.lane.b32.xlu0 %v761, 8
      %v831 = vpop.permute.xlu0 %830
      %832 = vrot.lane.b32.xlu0 %v774, 8
      %v833 = vpop.permute.xlu0 %832
      %834 = vrot.lane.b32.xlu0 %v787, 8
      %v835 = vpop.permute.xlu0 %834
      %836 = vrot.lane.b32.xlu0 %v800, 8
      %v837 = vpop.permute.xlu0 %836
      %838 = vrot.lane.b32.xlu0 %v813, 8
      %v839 = vpop.permute.xlu0 %838
      %v848 = vsel %vm294, %v704, %v825
      %v849 = vsel %vm294, %v705, %v827
      %v850 = vsel %vm294, %v706, %v829
      %v851 = vsel %vm294, %v707, %v831
      %v852 = vsel %vm294, %v708, %v833
      %v853 = vsel %vm294, %v709, %v835
      %v854 = vsel %vm294, %v710, %v837
      %v855 = vsel %vm294, %v711, %v839
      %vm856 = vcmask 123904
      %857 = vst.msk [vmem:[%s259] sm:$0x3] %vm856, %v848
      %858 = vst.msk [vmem:[%s259 + $0x2] sm:$0x3] %vm856, %v849
      %859 = vst.msk [vmem:[%s259 + $0x4] sm:$0x3] %vm856, %v850
      %860 = vst.msk [vmem:[%s259 + $0x6] sm:$0x3] %vm856, %v851
      %861 = vst.msk [vmem:[%s259 + $0x8] sm:$0x3] %vm856, %v852
      %862 = vst.msk [vmem:[%s259 + $0xa] sm:$0x3] %vm856, %v853
      %863 = vst.msk [vmem:[%s259 + $0xc] sm:$0x3] %vm856, %v854
      %864 = vst.msk [vmem:[%s259 + $0xe] sm:$0x3] %vm856, %v855
      %s865 = smul.u32 8, %s15
      %p866 = scmp.lt.s32.totalorder %s865, 31
      %s867 = scalar_select %p866, %s865, 31
      %s868 = smul.addr %s867, 2
      %s869 = scalar_lea.vmem %s4, %s868
      // Predicated region
      $region37: #{tpu_custom_call.1} parent=35 // pred_check
        %p870 = pneg %p137
      $region38: #{tpu_custom_call.1} parent=35 // pred_check_branch
        %872 = sbr.rel (%p870) target = $region40
      $region39: #{tpu_custom_call.1} parent=35 // pred_region
        %s873 = smul.u32 8, %s15
      $region40: #{tpu_custom_call.1} parent=35 // pred_fallthru
        _
    $region36: #{tpu_custom_call.1} parent=5 // pred_fallthru
      _
    %p874 = scmp.le.s32.totalorder 2, %s10
    // Predicated region
    $region41: #{tpu_custom_call.1} parent=5 // pred_check
      %p875 = pneg %p874
    $region42: #{tpu_custom_call.1} parent=5 // pred_check_branch
      %877 = sbr.rel (%p875) target = $region44
    $region43: #{tpu_custom_call.1} parent=5 // pred_region
      %s878 = ssub.s32 %s10, 2
      // Predicated region
      $region45: #{tpu_custom_call.1} parent=43 // pred_check
        %p879 = pneg %p143
      $region46: #{tpu_custom_call.1} parent=43 // pred_check_branch
        %881 = sbr.rel (%p879) target = $region48
      $region47: #{tpu_custom_call.1} parent=43 // pred_region
        %s882 = smul.u32 8, %s16
        %p883 = scmp.lt.s32.totalorder %s882, 31
        %s884 = scalar_select %p883, %s882, 31
        %s885 = smul.addr %s884, 2
        %s886 = scalar_lea.vmem %s4, %s885
      $region48: #{tpu_custom_call.1} parent=43 // pred_fallthru
        _
    $region44: #{tpu_custom_call.1} parent=5 // pred_fallthru
      _
  $region6: #{tpu_custom_call.1} parent=0 // loop_footer
    %s14 = sadd.s32 1, %s10
  $region7: #{tpu_custom_call.1} parent=0 // loop_footer_branch
    %9 = sbr.rel target = $region3
  $region8: #{tpu_custom_call.1} parent=0 // loop_exit
    _

</llo_original>
